<compile_context>
chip_gen: v7x
topology: tpu7x:2x2x1
jax: 0.10.0
libtpu: 0.0.40
codegen_flags: <defaults>
</compile_context>

<pallas_src>
import jax
import jax.numpy as jnp
from jax.experimental import pallas as pl
from jax.experimental.pallas import tpu as pltpu

H1 = 128        # fc1 width (already a multiple of 128 lanes)
H2 = 200        # fc2 width in the PyTorch module
H2_PAD = 256    # fc2 width padded to a lane multiple
OUT_PAD = 128   # lane-dense Q output slab width (column 0 holds q)


def _round_up(n, m):
    return ((n + m - 1) // m) * m


def _critic_kernel(x_ref, a_ref, w1x_ref, w1a_ref, b1_ref,
                   w2_ref, b2_ref, w3_ref, b3_ref, q_ref):
    # fc1 + relu  (concat folded into split weights: x @ W1x + a @ W1a)
    h1 = jnp.dot(x_ref[...], w1x_ref[...], preferred_element_type=jnp.float32)
    h1 = h1 + jnp.dot(a_ref[...], w1a_ref[...],
                      preferred_element_type=jnp.float32)
    h1 = jnp.maximum(h1 + b1_ref[...], 0.0)

    # fc2 + relu  (padded to 256 lanes; padded columns stay exactly zero)
    h2 = jnp.dot(h1, w2_ref[...], preferred_element_type=jnp.float32)
    h2 = jnp.maximum(h2 + b2_ref[...], 0.0)

    # fc3 (Q head): lane-dense (TB, 128) slab; only column 0 is meaningful.
    # b3 is a scalar from SMEM; adding it to every lane is harmless since the
    # wrapper only reads column 0.
    q = jnp.dot(h2, w3_ref[...], preferred_element_type=jnp.float32)
    q_ref[...] = q + b3_ref[0, 0]


def pack_params(params, obs_dims):
    """One-time repack: split W1 by rows, zero-pad 200->256 and W3 out->128."""
    w1 = params["w1"].astype(jnp.float32)            # (obs+act, 128)
    w1x, w1a = w1[:obs_dims], w1[obs_dims:]
    b1 = params["b1"].reshape(1, H1).astype(jnp.float32)

    w2 = jnp.zeros((H1, H2_PAD), jnp.float32).at[:, :H2].set(
        params["w2"].astype(jnp.float32))
    b2 = jnp.zeros((1, H2_PAD), jnp.float32).at[:, :H2].set(
        params["b2"].reshape(1, H2).astype(jnp.float32))
    w3 = jnp.zeros((H2_PAD, OUT_PAD), jnp.float32).at[:H2, :1].set(
        params["w3"].astype(jnp.float32))
    b3 = params["b3"].reshape(1, 1).astype(jnp.float32)
    return {"w1x": w1x, "w1a": w1a, "b1": b1,
            "w2": w2, "b2": b2, "w3": w3, "b3": b3}


def critic_forward(x, action, packed, *, tb=512):
    """Pallas forward of the DDPG CriticNetwork.

    x:      (B, obs_dims) float32
    action: (B, act_dims) float32
    packed: output of pack_params(...)
    Returns (B, 1) float32 Q-values.
    """
    B, obs_dims = x.shape
    act_dims = action.shape[1]
    x = x.astype(jnp.float32)
    action = action.astype(jnp.float32)

    # Batch tile: multiple of 8 sublanes, clamped to the (padded) batch.
    tb = max(8, min(tb, _round_up(B, 8)))
    b_pad = _round_up(B, tb)
    if b_pad != B:
        x = jnp.pad(x, ((0, b_pad - B), (0, 0)))
        action = jnp.pad(action, ((0, b_pad - B), (0, 0)))

    grid = (b_pad // tb,)

    def resident(shape):
        # Weight/bias tiles: same block every grid step -> stays in VMEM.
        return pl.BlockSpec(shape, lambda i: (0, 0))

    in_specs = [
        pl.BlockSpec((tb, obs_dims), lambda i: (i, 0)),     # x tile
        pl.BlockSpec((tb, act_dims), lambda i: (i, 0)),     # action tile
        resident((obs_dims, H1)),                           # w1x
        resident((act_dims, H1)),                           # w1a
        resident((1, H1)),                                  # b1
        resident((H1, H2_PAD)),                             # w2 (padded)
        resident((1, H2_PAD)),                              # b2 (padded)
        resident((H2_PAD, OUT_PAD)),                        # w3 (padded)
        pl.BlockSpec(memory_space=pltpu.MemorySpace.SMEM),  # b3 scalar
    ]
    out_spec = pl.BlockSpec((tb, OUT_PAD), lambda i: (i, 0))

    q_slab = pl.pallas_call(
        _critic_kernel,
        out_shape=jax.ShapeDtypeStruct((b_pad, OUT_PAD), jnp.float32),
        grid=grid,
        in_specs=in_specs,
        out_specs=out_spec,
        compiler_params=pltpu.CompilerParams(
            dimension_semantics=("parallel",)),
    )(x, action, packed["w1x"], packed["w1a"], packed["b1"],
      packed["w2"], packed["b2"], packed["w3"], packed["b3"])

    return q_slab[:B, :1]


def init_params(key, obs_dims, act_dims):
    """Deterministic init mimicking nn.Linear's U(-1/sqrt(fan_in), 1/sqrt(fan_in)).
    Weights stored as (in, out), i.e. transposed vs PyTorch's (out, in)."""
    def linear(key, fan_in, fan_out):
        kw, kb = jax.random.split(key)
        bound = 1.0 / jnp.sqrt(float(fan_in))
        w = jax.random.uniform(kw, (fan_in, fan_out), jnp.float32,
                               minval=-bound, maxval=bound)
        b = jax.random.uniform(kb, (1, fan_out), jnp.float32,
                               minval=-bound, maxval=bound)
        return w, b

    k1, k2, k3 = jax.random.split(key, 3)
    in_dim = obs_dims + act_dims
    w1, b1 = linear(k1, in_dim, 128)
    w2, b2 = linear(k2, 128, 200)
    w3, b3 = linear(k3, 200, 1)
    return {"w1": w1, "b1": b1, "w2": w2, "b2": b2, "w3": w3, "b3": b3}


def _reference(x, action, p):
    """Pure-JAX reference mirroring the PyTorch forward (unpadded params)."""
    h = jnp.concatenate([x, action], axis=1)
    h = jax.nn.relu(h @ p["w1"] + p["b1"])
    h = jax.nn.relu(h @ p["w2"] + p["b2"])
    return h @ p["w3"] + p["b3"]


if __name__ == "__main__":
    # Pendulum-style dims: obs=3, action=1; small batch.
    obs_dims, act_dims, batch = 3, 1, 8

    key = jax.random.PRNGKey(0)
    kx, ka, kp = jax.random.split(key, 3)
    x = jax.random.normal(kx, (batch, obs_dims), jnp.float32)
    action = jax.random.normal(ka, (batch, act_dims), jnp.float32)
    params = init_params(kp, obs_dims, act_dims)
    packed = pack_params(params, obs_dims)

    q = jax.block_until_ready(critic_forward(x, action, packed))
    q_ref = _reference(x, action, params)
    assert q.shape == (batch, 1), q.shape
    # Loose tolerance: MXU matmul rounding may differ from XLA's default dot.
    assert jnp.allclose(q, q_ref, atol=1e-2, rtol=1e-2), (q, q_ref)

    # Also exercise the batch grid: multiple tiles + ragged tail padding.
    kx2, ka2 = jax.random.split(jax.random.PRNGKey(1))
    big = 300
    x2 = jax.random.normal(kx2, (big, obs_dims), jnp.float32)
    a2 = jax.random.normal(ka2, (big, act_dims), jnp.float32)
    q2 = jax.block_until_ready(critic_forward(x2, a2, packed, tb=128))
    q2_ref = _reference(x2, a2, params)
    assert q2.shape == (big, 1), q2.shape
    assert jnp.allclose(q2, q2_ref, atol=1e-2, rtol=1e-2)

    print("KERNEL_OK")
</pallas_src>

<mosaic_0001>
module attributes {stable_mosaic.version = 11 : i64} {
  func.func @_critic_kernel(%arg0: i32, %arg1: memref<8x3xf32, #tpu.memory_space<vmem>>, %arg2: memref<8x1xf32, #tpu.memory_space<vmem>>, %arg3: memref<3x128xf32, #tpu.memory_space<vmem>>, %arg4: memref<1x128xf32, #tpu.memory_space<vmem>>, %arg5: memref<1x128xf32, #tpu.memory_space<vmem>>, %arg6: memref<128x256xf32, #tpu.memory_space<vmem>>, %arg7: memref<1x256xf32, #tpu.memory_space<vmem>>, %arg8: memref<256x128xf32, #tpu.memory_space<vmem>>, %arg9: memref<1x1xf32, #tpu.memory_space<smem>>, %arg10: memref<8x128xf32, #tpu.memory_space<vmem>>) attributes {dimension_semantics = [#tpu.dimension_semantics<parallel>], iteration_bounds = array<i64: 1>, scalar_prefetch = 0 : i64, scratch_operands = 0 : i64, tpu.core_type = #tpu.core_type<tc>, window_params = [{transform_indices = @transform_0, window_bounds = array<i64: 8, 3>}, {transform_indices = @transform_1, window_bounds = array<i64: 8, 1>}, {pipeline_mode = #tpu.pipeline_mode<synchronous>, transform_indices = @transform_2, window_bounds = array<i64: 3, 128>}, {pipeline_mode = #tpu.pipeline_mode<synchronous>, transform_indices = @transform_3, window_bounds = array<i64: 1, 128>}, {pipeline_mode = #tpu.pipeline_mode<synchronous>, transform_indices = @transform_4, window_bounds = array<i64: 1, 128>}, {pipeline_mode = #tpu.pipeline_mode<synchronous>, transform_indices = @transform_5, window_bounds = array<i64: 128, 256>}, {pipeline_mode = #tpu.pipeline_mode<synchronous>, transform_indices = @transform_6, window_bounds = array<i64: 1, 256>}, {pipeline_mode = #tpu.pipeline_mode<synchronous>, transform_indices = @transform_7, window_bounds = array<i64: 256, 128>}, {transform_indices = @transform_8, window_bounds = array<i64: 1, 1>}, {transform_indices = @transform_9, window_bounds = array<i64: 8, 128>}]} {
    %c0 = arith.constant 0 : index
    %c0_0 = arith.constant 0 : index
    %0 = vector.load %arg1[%c0, %c0_0] : memref<8x3xf32, #tpu.memory_space<vmem>>, vector<8x3xf32>
    %c0_1 = arith.constant 0 : index
    %c0_2 = arith.constant 0 : index
    %1 = vector.load %arg3[%c0_1, %c0_2] : memref<3x128xf32, #tpu.memory_space<vmem>>, vector<3x128xf32>
    %cst = arith.constant dense<0.000000e+00> : vector<8x128xf32>
    %2 = tpu.matmul %0, %1, %cst {dimension_numbers = #tpu.dot_dimension_numbers<[1], [0], [0], [1], [0, 0, 1, 1], [], []>} : vector<8x3xf32>, vector<3x128xf32>, vector<8x128xf32> -> vector<8x128xf32>
    %c0_3 = arith.constant 0 : index
    %c0_4 = arith.constant 0 : index
    %3 = vector.load %arg2[%c0_3, %c0_4] : memref<8x1xf32, #tpu.memory_space<vmem>>, vector<8x1xf32>
    %c0_5 = arith.constant 0 : index
    %c0_6 = arith.constant 0 : index
    %4 = vector.load %arg4[%c0_5, %c0_6] : memref<1x128xf32, #tpu.memory_space<vmem>>, vector<1x128xf32>
    %cst_7 = arith.constant dense<0.000000e+00> : vector<8x128xf32>
    %5 = tpu.matmul %3, %4, %cst_7 {dimension_numbers = #tpu.dot_dimension_numbers<[1], [0], [0], [1], [0, 0, 1, 1], [], []>} : vector<8x1xf32>, vector<1x128xf32>, vector<8x128xf32> -> vector<8x128xf32>
    %6 = arith.addf %2, %5 : vector<8x128xf32>
    %c0_8 = arith.constant 0 : index
    %c0_9 = arith.constant 0 : index
    %7 = vector.load %arg5[%c0_8, %c0_9] : memref<1x128xf32, #tpu.memory_space<vmem>>, vector<1x128xf32>
    %8 = vector.broadcast %7 : vector<1x128xf32> to vector<8x128xf32>
    %9 = arith.addf %6, %8 : vector<8x128xf32>
    %cst_10 = arith.constant 0.000000e+00 : f32
    %10 = vector.broadcast %cst_10 : f32 to vector<8x128xf32>
    %11 = arith.maximumf %9, %10 : vector<8x128xf32>
    %c0_11 = arith.constant 0 : index
    %c0_12 = arith.constant 0 : index
    %12 = vector.load %arg6[%c0_11, %c0_12] : memref<128x256xf32, #tpu.memory_space<vmem>>, vector<128x256xf32>
    %cst_13 = arith.constant dense<0.000000e+00> : vector<8x256xf32>
    %13 = tpu.matmul %11, %12, %cst_13 {dimension_numbers = #tpu.dot_dimension_numbers<[1], [0], [0], [1], [0, 0, 1, 1], [], []>} : vector<8x128xf32>, vector<128x256xf32>, vector<8x256xf32> -> vector<8x256xf32>
    %c0_14 = arith.constant 0 : index
    %c0_15 = arith.constant 0 : index
    %14 = vector.load %arg7[%c0_14, %c0_15] : memref<1x256xf32, #tpu.memory_space<vmem>>, vector<1x256xf32>
    %15 = vector.broadcast %14 : vector<1x256xf32> to vector<8x256xf32>
    %16 = arith.addf %13, %15 : vector<8x256xf32>
    %cst_16 = arith.constant 0.000000e+00 : f32
    %17 = vector.broadcast %cst_16 : f32 to vector<8x256xf32>
    %18 = arith.maximumf %16, %17 : vector<8x256xf32>
    %c0_17 = arith.constant 0 : index
    %c0_18 = arith.constant 0 : index
    %19 = vector.load %arg8[%c0_17, %c0_18] : memref<256x128xf32, #tpu.memory_space<vmem>>, vector<256x128xf32>
    %cst_19 = arith.constant dense<0.000000e+00> : vector<8x128xf32>
    %20 = tpu.matmul %18, %19, %cst_19 {dimension_numbers = #tpu.dot_dimension_numbers<[1], [0], [0], [1], [0, 0, 1, 1], [], []>} : vector<8x256xf32>, vector<256x128xf32>, vector<8x128xf32> -> vector<8x128xf32>
    %c0_20 = arith.constant 0 : index
    %c0_21 = arith.constant 0 : index
    %21 = memref.load %arg9[%c0_20, %c0_21] : memref<1x1xf32, #tpu.memory_space<smem>>
    %22 = vector.broadcast %21 : f32 to vector<8x128xf32>
    %23 = arith.addf %20, %22 : vector<8x128xf32>
    %c0_22 = arith.constant 0 : index
    %c0_23 = arith.constant 0 : index
    %24 = vector.load %arg10[%c0_22, %c0_23] : memref<8x128xf32, #tpu.memory_space<vmem>>, vector<8x128xf32>
    tpu.vector_store %arg10[%c0_22, %c0_23], %23 {strides = array<i32>} : memref<8x128xf32, #tpu.memory_space<vmem>>, vector<8x128xf32>,
    return
  }
  func.func @transform_0(%arg0: i32) -> (i32, i32) {
    %c0_i32 = arith.constant 0 : i32
    %c0_i32_0 = arith.constant 0 : i32
    return %arg0, %c0_i32 : i32, i32
  }
  func.func @transform_1(%arg0: i32) -> (i32, i32) {
    %c0_i32 = arith.constant 0 : i32
    %c0_i32_0 = arith.constant 0 : i32
    return %arg0, %c0_i32 : i32, i32
  }
  func.func @transform_2(%arg0: i32) -> (i32, i32) {
    %c0_i32 = arith.constant 0 : i32
    %c0_i32_0 = arith.constant 0 : i32
    %c0_i32_1 = arith.constant 0 : i32
    return %c0_i32, %c0_i32_0 : i32, i32
  }
  func.func @transform_3(%arg0: i32) -> (i32, i32) {
    %c0_i32 = arith.constant 0 : i32
    %c0_i32_0 = arith.constant 0 : i32
    %c0_i32_1 = arith.constant 0 : i32
    return %c0_i32, %c0_i32_0 : i32, i32
  }
  func.func @transform_4(%arg0: i32) -> (i32, i32) {
    %c0_i32 = arith.constant 0 : i32
    %c0_i32_0 = arith.constant 0 : i32
    %c0_i32_1 = arith.constant 0 : i32
    return %c0_i32, %c0_i32_0 : i32, i32
  }
  func.func @transform_5(%arg0: i32) -> (i32, i32) {
    %c0_i32 = arith.constant 0 : i32
    %c0_i32_0 = arith.constant 0 : i32
    %c0_i32_1 = arith.constant 0 : i32
    return %c0_i32, %c0_i32_0 : i32, i32
  }
  func.func @transform_6(%arg0: i32) -> (i32, i32) {
    %c0_i32 = arith.constant 0 : i32
    %c0_i32_0 = arith.constant 0 : i32
    %c0_i32_1 = arith.constant 0 : i32
    return %c0_i32, %c0_i32_0 : i32, i32
  }
  func.func @transform_7(%arg0: i32) -> (i32, i32) {
    %c0_i32 = arith.constant 0 : i32
    %c0_i32_0 = arith.constant 0 : i32
    %c0_i32_1 = arith.constant 0 : i32
    return %c0_i32, %c0_i32_0 : i32, i32
  }
  func.func @transform_8(%arg0: i32) -> (i32, i32) {
    %c0_i32 = arith.constant 0 : i32
    %c0_i32_0 = arith.constant 0 : i32
    %c0_i32_1 = arith.constant 0 : i32
    return %c0_i32, %c0_i32_0 : i32, i32
  }
  func.func @transform_9(%arg0: i32) -> (i32, i32) {
    %c0_i32 = arith.constant 0 : i32
    %c0_i32_0 = arith.constant 0 : i32
    return %arg0, %c0_i32 : i32, i32
  }
}

</mosaic_0001>

<llo_original>
// kernel: tpu_custom_call.1
$region0: #{tpu_custom_call.1}
  #allocation0 [shape = 'u32[]', space=smem, size = 0x4, offset = 0x4, fixed_abs, tag = 'smem constant byte address 0x4 - core index']
  #allocation1 [shape = 'u32[144,128]{1,0:T(1,128)}', space=vmem, size = 0x12000, scoped, tag = 'internal scratch']
  #allocation2 [shape = 'f32[1,1]{1,0:T(1,128)S(6)}', space=smem, size = 0x200, scoped, tag = 'scoped memory for tpu_custom_call.1']
  %s0 = inlined_call_operand.vmem [shape: f32[8,3], index: 0, kind: input, shape index: {}]
  %s1 = inlined_call_operand.vmem [shape: f32[8,1], index: 1, kind: input, shape index: {}]
  %s2 = inlined_call_operand.vmem [shape: f32[3,128], index: 2, kind: input, shape index: {}]
  %s3 = inlined_call_operand.vmem [shape: f32[1,128], index: 3, kind: input, shape index: {}]
  %s4 = inlined_call_operand.vmem [shape: f32[1,128], index: 4, kind: input, shape index: {}]
  %s5 = inlined_call_operand.hbm [shape: f32[128,256], index: 5, kind: input, shape index: {}]
  %s6 = inlined_call_operand.vmem [shape: f32[1,256], index: 6, kind: input, shape index: {}]
  %s7 = inlined_call_operand.hbm [shape: f32[256,128], index: 7, kind: input, shape index: {}]
  %s8 = inlined_call_operand.<no memory space> [shape: f32[1,1], index: 8, kind: input, shape index: {}]
  %s9 = inlined_call_operand.hbm [shape: f32[8,128], index: 9, kind: output, shape index: {}]
  %s10 = sld [smem:[#allocation0]]
  $region54: #{tpu_custom_call.1} parent=0
    _
  %s12 = ssub.s32 1, %s10
  %s13 = scalar_select 0, %s12, %s10
  %14 = sst [smem:[#allocation2]] %s8
  $region1: #{tpu_custom_call.1} parent=0
    #allocation3 [shape = 'u8[131072]{0}', space=vmem, size = 0x20000, scoped, tag = 'input window, operand 5, single buffered']
    #allocation4 [shape = 's32[1]{0}', space=sflag, size = 0x4, scoped, tag = 'scoped memory for tpu_custom_call.1']
    #allocation5 [shape = 's32[1]{0}', space=sflag, size = 0x4, scoped, tag = 'scoped memory for tpu_custom_call.1']
    #allocation6 [shape = 'u8[131072]{0}', space=vmem, size = 0x20000, scoped, tag = 'input window, operand 7, single buffered']
    #allocation7 [shape = 's32[1]{0}', space=sflag, size = 0x4, scoped, tag = 'scoped memory for tpu_custom_call.1']
    #allocation8 [shape = 'u8[4096]{0}', space=vmem, size = 0x1000, scoped, tag = 'output window, operand 0, single buffered']
    %15 = vsyncpa [#allocation4], 0
    %16 = vsyncpa [#allocation7], 0
    %17 = vsyncpa [#allocation5], 0
    // Predicated region
    $region2: #{tpu_custom_call.1} parent=1 // pred_check
      _
    $region3: #{tpu_custom_call.1} parent=1 // pred_check_branch
      %19 = sbr.rel (0) target = $region5
    $region4: #{tpu_custom_call.1} parent=1 // pred_region
      _
    $region5: #{tpu_custom_call.1} parent=1 // pred_fallthru
      _
    // Predicated region
    $region6: #{tpu_custom_call.1} parent=1 // pred_check
      _
    $region7: #{tpu_custom_call.1} parent=1 // pred_check_branch
      %21 = sbr.rel (0) target = $region9
    $region8: #{tpu_custom_call.1} parent=1 // pred_region
      _
    $region9: #{tpu_custom_call.1} parent=1 // pred_fallthru
      _
    // Predicated region
    $region10: #{tpu_custom_call.1} parent=1 // pred_check
      _
    $region11: #{tpu_custom_call.1} parent=1 // pred_check_branch
      %23 = sbr.rel (0) target = $region13
    $region12: #{tpu_custom_call.1} parent=1 // pred_region
      _
    $region13: #{tpu_custom_call.1} parent=1 // pred_fallthru
      _
    // Predicated region
    $region14: #{tpu_custom_call.1} parent=1 // pred_check
      _
    $region15: #{tpu_custom_call.1} parent=1 // pred_check_branch
      %25 = sbr.rel (0) target = $region17
    $region16: #{tpu_custom_call.1} parent=1 // pred_region
      _
    $region17: #{tpu_custom_call.1} parent=1 // pred_fallthru
      _
    // Predicated region
    $region18: #{tpu_custom_call.1} parent=1 // pred_check
      _
    $region19: #{tpu_custom_call.1} parent=1 // pred_check_branch
      %27 = sbr.rel (0) target = $region21
    $region20: #{tpu_custom_call.1} parent=1 // pred_region
      _
    $region21: #{tpu_custom_call.1} parent=1 // pred_fallthru
      _
    // Predicated region
    $region22: #{tpu_custom_call.1} parent=1 // pred_check
      _
    $region23: #{tpu_custom_call.1} parent=1 // pred_check_branch
      %29 = sbr.rel (0) target = $region25
    $region24: #{tpu_custom_call.1} parent=1 // pred_region
      %s31 = ssub.s32 4096, 4096
      %32 = vsyncadd [#allocation4], %s31
      %s33 = sshll.u32 [#allocation3], 4
      %s34 = int_to_ptr.vmem [resolvable:$true] %s33
      %39 = dma.hbm_to_vmem [thread:$0]  %s5, 4096, %s34, [#allocation4], 256, 256, 16
    $region25: #{tpu_custom_call.1} parent=1 // pred_fallthru
      _
    // Predicated region
    $region26: #{tpu_custom_call.1} parent=1 // pred_check
      _
    $region27: #{tpu_custom_call.1} parent=1 // pred_check_branch
      %41 = sbr.rel (0) target = $region29
    $region28: #{tpu_custom_call.1} parent=1 // pred_region
      _
    $region29: #{tpu_custom_call.1} parent=1 // pred_fallthru
      _
    // Predicated region
    $region30: #{tpu_custom_call.1} parent=1 // pred_check
      _
    $region31: #{tpu_custom_call.1} parent=1 // pred_check_branch
      %43 = sbr.rel (0) target = $region33
    $region32: #{tpu_custom_call.1} parent=1 // pred_region
      %s45 = ssub.s32 4096, 4096
      %46 = vsyncadd [#allocation7], %s45
      %s47 = sshll.u32 [#allocation6], 4
      %s48 = int_to_ptr.vmem [resolvable:$true] %s47
      %53 = dma.hbm_to_vmem [thread:$0]  %s7, 4096, %s48, [#allocation7], 128, 128, 8
    $region33: #{tpu_custom_call.1} parent=1 // pred_fallthru
      _
    // Predicated region
    $region34: #{tpu_custom_call.1} parent=1 // pred_check
      _
    $region35: #{tpu_custom_call.1} parent=1 // pred_check_branch
      %55 = sbr.rel (0) target = $region37
    $region36: #{tpu_custom_call.1} parent=1 // pred_region
      _
    $region37: #{tpu_custom_call.1} parent=1 // pred_fallthru
      _
    // Predicated region
    $region38: #{tpu_custom_call.1} parent=1 // pred_check
      _
    $region39: #{tpu_custom_call.1} parent=1 // pred_check_branch
      %57 = sbr.rel (0) target = $region41
    $region40: #{tpu_custom_call.1} parent=1 // pred_region
      %58 = dma.done [#allocation4], 4096
    $region41: #{tpu_custom_call.1} parent=1 // pred_fallthru
      _
    // Predicated region
    $region42: #{tpu_custom_call.1} parent=1 // pred_check
      _
    $region43: #{tpu_custom_call.1} parent=1 // pred_check_branch
      %60 = sbr.rel (0) target = $region45
    $region44: #{tpu_custom_call.1} parent=1 // pred_region
      %61 = dma.done [#allocation7], 4096
    $region45: #{tpu_custom_call.1} parent=1 // pred_fallthru
      _
    %v62 = vld [vmem:[%s0] sm:$0xff]
    %v63 = vld [vmem:[%s2] sm:$0x7]
    %v64 = vld [vmem:[%s1] sm:$0xff]
    %v65 = vld [vmem:[%s3] sm:$0x1]
    %vm66 = vcmask 7168
    %v68 = vsel %vm66, %v64, 0
    %vm70 = vcmask 1040384
    %v72 = vsel %vm70, %v65, 0
    %74 = vmatprep.subr.mxu0 0.0
    %75 = vmatpush1.msra.mxu0 %v72
    %76 = vmatprep.subr.mxu0 0.0
    %77 = vmatpush1.msra.mxu0 0.0
    %78 = vmatprep.subr.mxu0 0.0
    %79 = vmatpush1.msra.mxu0 0.0
    %80 = vmatprep.subr.mxu0 0.0
    %81 = vmatpush1.msra.mxu0 0.0
    %82 = vmatprep.subr.mxu0 0.0
    %83 = vmatpush1.msra.mxu0 0.0
    %84 = vmatprep.subr.mxu0 0.0
    %85 = vmatpush1.msra.mxu0 0.0
    %86 = vmatprep.subr.mxu0 0.0
    %87 = vmatpush1.msra.mxu0 0.0
    %88 = vmatprep.subr.mxu0 0.0
    %89 = vmatpush1.msra.mxu0 0.0
    %90 = vmatprep.subr.mxu0 0.0
    %91 = vmatpush1.msra.mxu0 0.0
    %92 = vmatprep.subr.mxu0 0.0
    %93 = vmatpush1.msra.mxu0 0.0
    %94 = vmatprep.subr.mxu0 0.0
    %95 = vmatpush1.msra.mxu0 0.0
    %96 = vmatprep.subr.mxu0 0.0
    %97 = vmatpush1.msra.mxu0 0.0
    %98 = vmatprep.subr.mxu0 0.0
    %99 = vmatpush1.msra.mxu0 0.0
    %100 = vmatprep.subr.mxu0 0.0
    %101 = vmatpush1.msra.mxu0 0.0
    %102 = vmatprep.subr.mxu0 0.0
    %103 = vmatpush1.msra.mxu0 0.0
    %104 = vmatprep.subr.mxu0 0.0
    %105 = vmatpush1.msra.mxu0 0.0
    %106 = vmatprep.subr.mxu0 0.0
    %107 = vmatpush1.msra.mxu0 0.0
    %108 = vmatprep.subr.mxu0 0.0
    %109 = vmatpush1.msra.mxu0 0.0
    %110 = vmatprep.subr.mxu0 0.0
    %111 = vmatpush1.msra.mxu0 0.0
    %112 = vmatprep.subr.mxu0 0.0
    %113 = vmatpush1.msra.mxu0 0.0
    %114 = vmatprep.subr.mxu0 0.0
    %115 = vmatpush1.msra.mxu0 0.0
    %116 = vmatprep.subr.mxu0 0.0
    %117 = vmatpush1.msra.mxu0 0.0
    %118 = vmatprep.subr.mxu0 0.0
    %119 = vmatpush1.msra.mxu0 0.0
    %120 = vmatprep.subr.mxu0 0.0
    %121 = vmatpush1.msra.mxu0 0.0
    %122 = vmatprep.subr.mxu0 0.0
    %123 = vmatpush1.msra.mxu0 0.0
    %124 = vmatprep.subr.mxu0 0.0
    %125 = vmatpush1.msra.mxu0 0.0
    %126 = vmatprep.subr.mxu0 0.0
    %127 = vmatpush1.msra.mxu0 0.0
    %128 = vmatprep.subr.mxu0 0.0
    %129 = vmatpush1.msra.mxu0 0.0
    %130 = vmatprep.subr.mxu0 0.0
    %131 = vmatpush1.msra.mxu0 0.0
    %132 = vmatprep.subr.mxu0 0.0
    %133 = vmatpush1.msra.mxu0 0.0
    %134 = vmatprep.subr.mxu0 0.0
    %135 = vmatpush1.msra.mxu0 0.0
    %136 = vmatprep.subr.mxu0 0.0
    %137 = vmatpush1.msra.mxu0 0.0
    %138 = vmatprep.mubr.f32.mxu0 0.0
    %139 = vmatmul.mubr.f32.gmra.mrb[0].mxu0 %v68
    %v140 = vpop.f32.mrb[0].mxu0
    %v141 = vadd.f32 0.0, %v140
    %v142 = vpop.f32.mrb[0].mxu0
    %143 = vdwg.mxu0
    %vm144 = vcmask 23552
    %v146 = vsel %vm144, %v62, 0
    %vm148 = vcmask 1042432
    %v150 = vsel %vm148, %v63, 0
    %152 = vmatprep.subr.mxu0 0.0
    %153 = vmatpush1.msra.mxu0 %v150
    %154 = vmatprep.subr.mxu0 0.0
    %155 = vmatpush1.msra.mxu0 0.0
    %156 = vmatprep.subr.mxu0 0.0
    %157 = vmatpush1.msra.mxu0 0.0
    %158 = vmatprep.subr.mxu0 0.0
    %159 = vmatpush1.msra.mxu0 0.0
    %160 = vmatprep.subr.mxu0 0.0
    %161 = vmatpush1.msra.mxu0 0.0
    %162 = vmatprep.subr.mxu0 0.0
    %163 = vmatpush1.msra.mxu0 0.0
    %164 = vmatprep.subr.mxu0 0.0
    %165 = vmatpush1.msra.mxu0 0.0
    %166 = vmatprep.subr.mxu0 0.0
    %167 = vmatpush1.msra.mxu0 0.0
    %168 = vmatprep.subr.mxu0 0.0
    %169 = vmatpush1.msra.mxu0 0.0
    %170 = vmatprep.subr.mxu0 0.0
    %171 = vmatpush1.msra.mxu0 0.0
    %172 = vmatprep.subr.mxu0 0.0
    %173 = vmatpush1.msra.mxu0 0.0
    %174 = vmatprep.subr.mxu0 0.0
    %175 = vmatpush1.msra.mxu0 0.0
    %176 = vmatprep.subr.mxu0 0.0
    %177 = vmatpush1.msra.mxu0 0.0
    %178 = vmatprep.subr.mxu0 0.0
    %179 = vmatpush1.msra.mxu0 0.0
    %180 = vmatprep.subr.mxu0 0.0
    %181 = vmatpush1.msra.mxu0 0.0
    %182 = vmatprep.subr.mxu0 0.0
    %183 = vmatpush1.msra.mxu0 0.0
    %184 = vmatprep.subr.mxu0 0.0
    %185 = vmatpush1.msra.mxu0 0.0
    %186 = vmatprep.subr.mxu0 0.0
    %187 = vmatpush1.msra.mxu0 0.0
    %188 = vmatprep.subr.mxu0 0.0
    %189 = vmatpush1.msra.mxu0 0.0
    %190 = vmatprep.subr.mxu0 0.0
    %191 = vmatpush1.msra.mxu0 0.0
    %192 = vmatprep.subr.mxu0 0.0
    %193 = vmatpush1.msra.mxu0 0.0
    %194 = vmatprep.subr.mxu0 0.0
    %195 = vmatpush1.msra.mxu0 0.0
    %196 = vmatprep.subr.mxu0 0.0
    %197 = vmatpush1.msra.mxu0 0.0
    %198 = vmatprep.subr.mxu0 0.0
    %199 = vmatpush1.msra.mxu0 0.0
    %200 = vmatprep.subr.mxu0 0.0
    %201 = vmatpush1.msra.mxu0 0.0
    %202 = vmatprep.subr.mxu0 0.0
    %203 = vmatpush1.msra.mxu0 0.0
    %204 = vmatprep.subr.mxu0 0.0
    %205 = vmatpush1.msra.mxu0 0.0
    %206 = vmatprep.subr.mxu0 0.0
    %207 = vmatpush1.msra.mxu0 0.0
    %208 = vmatprep.subr.mxu0 0.0
    %209 = vmatpush1.msra.mxu0 0.0
    %210 = vmatprep.subr.mxu0 0.0
    %211 = vmatpush1.msra.mxu0 0.0
    %212 = vmatprep.subr.mxu0 0.0
    %213 = vmatpush1.msra.mxu0 0.0
    %214 = vmatprep.subr.mxu0 0.0
    %215 = vmatpush1.msra.mxu0 0.0
    %216 = vmatprep.mubr.f32.mxu0 0.0
    %217 = vmatmul.mubr.f32.gmra.mrb[0].mxu0 %v146
    %v218 = vpop.f32.mrb[0].mxu0
    %v219 = vadd.f32 %v141, %v218
    %v220 = vpop.f32.mrb[0].mxu0
    %221 = vdwg.mxu0
    %v222 = vld [vmem:[%s4] sm:$0x1]
    %v224 = vlaneseq
    %v225 = vshrl.u32 %v224, 7
    %v226 = vsub.s32 0, %v225
    %v227 = vrot.slane %v222, %v226
    %v229 = vadd.f32 %v219, %v227
    %v230 = vmax.f32 %v229, 0.0
    %v231 = vld [vmem:[#allocation3] sm:$0xff]
    %v232 = vld [vmem:[#allocation3 + $0x8] sm:$0xff]
    %v233 = vld [vmem:[#allocation3 + $0x10] sm:$0xff]
    %v234 = vld [vmem:[#allocation3 + $0x18] sm:$0xff]
    %v235 = vld [vmem:[#allocation3 + $0x20] sm:$0xff]
    %v236 = vld [vmem:[#allocation3 + $0x28] sm:$0xff]
    %v237 = vld [vmem:[#allocation3 + $0x30] sm:$0xff]
    %v238 = vld [vmem:[#allocation3 + $0x38] sm:$0xff]
    %v239 = vld [vmem:[#allocation3 + $0x40] sm:$0xff]
    %v240 = vld [vmem:[#allocation3 + $0x48] sm:$0xff]
    %v241 = vld [vmem:[#allocation3 + $0x50] sm:$0xff]
    %v242 = vld [vmem:[#allocation3 + $0x58] sm:$0xff]
    %v243 = vld [vmem:[#allocation3 + $0x60] sm:$0xff]
    %v244 = vld [vmem:[#allocation3 + $0x68] sm:$0xff]
    %v245 = vld [vmem:[#allocation3 + $0x70] sm:$0xff]
    %v246 = vld [vmem:[#allocation3 + $0x78] sm:$0xff]
    %v247 = vld [vmem:[#allocation3 + $0x80] sm:$0xff]
    %v248 = vld [vmem:[#allocation3 + $0x88] sm:$0xff]
    %v249 = vld [vmem:[#allocation3 + $0x90] sm:$0xff]
    %v250 = vld [vmem:[#allocation3 + $0x98] sm:$0xff]
    %v251 = vld [vmem:[#allocation3 + $0xa0] sm:$0xff]
    %v252 = vld [vmem:[#allocation3 + $0xa8] sm:$0xff]
    %v253 = vld [vmem:[#allocation3 + $0xb0] sm:$0xff]
    %v254 = vld [vmem:[#allocation3 + $0xb8] sm:$0xff]
    %v255 = vld [vmem:[#allocation3 + $0xc0] sm:$0xff]
    %v256 = vld [vmem:[#allocation3 + $0xc8] sm:$0xff]
    %v257 = vld [vmem:[#allocation3 + $0xd0] sm:$0xff]
    %v258 = vld [vmem:[#allocation3 + $0xd8] sm:$0xff]
    %v259 = vld [vmem:[#allocation3 + $0xe0] sm:$0xff]
    %v260 = vld [vmem:[#allocation3 + $0xe8] sm:$0xff]
    %v261 = vld [vmem:[#allocation3 + $0xf0] sm:$0xff]
    %v262 = vld [vmem:[#allocation3 + $0xf8] sm:$0xff]
    %v263 = vld [vmem:[%s6] sm:$0x3]
    %v265 = vlaneseq
    %v266 = vshrl.u32 %v265, 7
    %v267 = vsub.s32 0, %v266
    %v268 = vrot.slane %v263, %v267
    %v269 = vlaneseq
    %v270 = vshrl.u32 %v269, 7
    %v271 = vsub.s32 1, %v270
    %v272 = vrot.slane %v263, %v271
    %275 = vmatprep.subr.mxu0 %v232
    %276 = vmatpush1.msra.mxu0 %v231
    %277 = vmatprep.subr.mxu0 %v234
    %278 = vmatpush1.msra.mxu0 %v233
    %279 = vmatprep.subr.mxu0 %v236
    %280 = vmatpush1.msra.mxu0 %v235
    %281 = vmatprep.subr.mxu0 %v238
    %282 = vmatpush1.msra.mxu0 %v237
    %283 = vmatprep.subr.mxu0 %v240
    %284 = vmatpush1.msra.mxu0 %v239
    %285 = vmatprep.subr.mxu0 %v242
    %286 = vmatpush1.msra.mxu0 %v241
    %287 = vmatprep.subr.mxu0 %v244
    %288 = vmatpush1.msra.mxu0 %v243
    %289 = vmatprep.subr.mxu0 %v246
    %290 = vmatpush1.msra.mxu0 %v245
    %291 = vmatprep.subr.mxu0 %v248
    %292 = vmatpush1.msra.mxu0 %v247
    %293 = vmatprep.subr.mxu0 %v250
    %294 = vmatpush1.msra.mxu0 %v249
    %295 = vmatprep.subr.mxu0 %v252
    %296 = vmatpush1.msra.mxu0 %v251
    %297 = vmatprep.subr.mxu0 %v254
    %298 = vmatpush1.msra.mxu0 %v253
    %299 = vmatprep.subr.mxu0 %v256
    %300 = vmatpush1.msra.mxu0 %v255
    %301 = vmatprep.subr.mxu0 %v258
    %302 = vmatpush1.msra.mxu0 %v257
    %303 = vmatprep.subr.mxu0 %v260
    %304 = vmatpush1.msra.mxu0 %v259
    %305 = vmatprep.subr.mxu0 %v262
    %306 = vmatpush1.msra.mxu0 %v261
    %307 = vmatprep.subr.mxu0 0.0
    %308 = vmatpush1.msra.mxu0 0.0
    %309 = vmatprep.subr.mxu0 0.0
    %310 = vmatpush1.msra.mxu0 0.0
    %311 = vmatprep.subr.mxu0 0.0
    %312 = vmatpush1.msra.mxu0 0.0
    %313 = vmatprep.subr.mxu0 0.0
    %314 = vmatpush1.msra.mxu0 0.0
    %315 = vmatprep.subr.mxu0 0.0
    %316 = vmatpush1.msra.mxu0 0.0
    %317 = vmatprep.subr.mxu0 0.0
    %318 = vmatpush1.msra.mxu0 0.0
    %319 = vmatprep.subr.mxu0 0.0
    %320 = vmatpush1.msra.mxu0 0.0
    %321 = vmatprep.subr.mxu0 0.0
    %322 = vmatpush1.msra.mxu0 0.0
    %323 = vmatprep.subr.mxu0 0.0
    %324 = vmatpush1.msra.mxu0 0.0
    %325 = vmatprep.subr.mxu0 0.0
    %326 = vmatpush1.msra.mxu0 0.0
    %327 = vmatprep.subr.mxu0 0.0
    %328 = vmatpush1.msra.mxu0 0.0
    %329 = vmatprep.subr.mxu0 0.0
    %330 = vmatpush1.msra.mxu0 0.0
    %331 = vmatprep.subr.mxu0 0.0
    %332 = vmatpush1.msra.mxu0 0.0
    %333 = vmatprep.subr.mxu0 0.0
    %334 = vmatpush1.msra.mxu0 0.0
    %335 = vmatprep.subr.mxu0 0.0
    %336 = vmatpush1.msra.mxu0 0.0
    %337 = vmatprep.subr.mxu0 0.0
    %338 = vmatpush1.msra.mxu0 0.0
    %339 = vmatprep.mubr.f32.mxu0 0.0
    %340 = vmatmul.mubr.f32.gmra.mrb[0].mxu0 %v230
    %v341 = vpop.f32.mrb[0].mxu0
    %v342 = vadd.f32 %v268, %v341
    %v343 = vpop.f32.mrb[0].mxu0
    %v344 = vadd.f32 %v272, %v343
    %345 = vdwg.mxu0
    %v346 = vmax.f32 %v342, 0.0
    %v347 = vmax.f32 %v344, 0.0
    %v348 = vld [vmem:[#allocation6] sm:$0xff]
    %v349 = vld [vmem:[#allocation6 + $0x8] sm:$0xff]
    %v350 = vld [vmem:[#allocation6 + $0x10] sm:$0xff]
    %v351 = vld [vmem:[#allocation6 + $0x18] sm:$0xff]
    %v352 = vld [vmem:[#allocation6 + $0x20] sm:$0xff]
    %v353 = vld [vmem:[#allocation6 + $0x28] sm:$0xff]
    %v354 = vld [vmem:[#allocation6 + $0x30] sm:$0xff]
    %v355 = vld [vmem:[#allocation6 + $0x38] sm:$0xff]
    %v356 = vld [vmem:[#allocation6 + $0x40] sm:$0xff]
    %v357 = vld [vmem:[#allocation6 + $0x48] sm:$0xff]
    %v358 = vld [vmem:[#allocation6 + $0x50] sm:$0xff]
    %v359 = vld [vmem:[#allocation6 + $0x58] sm:$0xff]
    %v360 = vld [vmem:[#allocation6 + $0x60] sm:$0xff]
    %v361 = vld [vmem:[#allocation6 + $0x68] sm:$0xff]
    %v362 = vld [vmem:[#allocation6 + $0x70] sm:$0xff]
    %v363 = vld [vmem:[#allocation6 + $0x78] sm:$0xff]
    %v364 = vld [vmem:[#allocation6 + $0x80] sm:$0xff]
    %v365 = vld [vmem:[#allocation6 + $0x88] sm:$0xff]
    %v366 = vld [vmem:[#allocation6 + $0x90] sm:$0xff]
    %v367 = vld [vmem:[#allocation6 + $0x98] sm:$0xff]
    %v368 = vld [vmem:[#allocation6 + $0xa0] sm:$0xff]
    %v369 = vld [vmem:[#allocation6 + $0xa8] sm:$0xff]
    %v370 = vld [vmem:[#allocation6 + $0xb0] sm:$0xff]
    %v371 = vld [vmem:[#allocation6 + $0xb8] sm:$0xff]
    %v372 = vld [vmem:[#allocation6 + $0xc0] sm:$0xff]
    %v373 = vld [vmem:[#allocation6 + $0xc8] sm:$0xff]
    %v374 = vld [vmem:[#allocation6 + $0xd0] sm:$0xff]
    %v375 = vld [vmem:[#allocation6 + $0xd8] sm:$0xff]
    %v376 = vld [vmem:[#allocation6 + $0xe0] sm:$0xff]
    %v377 = vld [vmem:[#allocation6 + $0xe8] sm:$0xff]
    %v378 = vld [vmem:[#allocation6 + $0xf0] sm:$0xff]
    %v379 = vld [vmem:[#allocation6 + $0xf8] sm:$0xff]
    %s380 = sld [smem:[#allocation2]]
    %v381 = vstv %s380
    %382 = vmatprep.subr.mxu0 0.0
    %383 = vmatpush1.msra.mxu0 %v348
    %384 = vmatprep.subr.mxu0 0.0
    %385 = vmatpush1.msra.mxu0 %v349
    %386 = vmatprep.subr.mxu0 0.0
    %387 = vmatpush1.msra.mxu0 %v350
    %388 = vmatprep.subr.mxu0 0.0
    %389 = vmatpush1.msra.mxu0 %v351
    %390 = vmatprep.subr.mxu0 0.0
    %391 = vmatpush1.msra.mxu0 %v352
    %392 = vmatprep.subr.mxu0 0.0
    %393 = vmatpush1.msra.mxu0 %v353
    %394 = vmatprep.subr.mxu0 0.0
    %395 = vmatpush1.msra.mxu0 %v354
    %396 = vmatprep.subr.mxu0 0.0
    %397 = vmatpush1.msra.mxu0 %v355
    %398 = vmatprep.subr.mxu0 0.0
    %399 = vmatpush1.msra.mxu0 %v356
    %400 = vmatprep.subr.mxu0 0.0
    %401 = vmatpush1.msra.mxu0 %v357
    %402 = vmatprep.subr.mxu0 0.0
    %403 = vmatpush1.msra.mxu0 %v358
    %404 = vmatprep.subr.mxu0 0.0
    %405 = vmatpush1.msra.mxu0 %v359
    %406 = vmatprep.subr.mxu0 0.0
    %407 = vmatpush1.msra.mxu0 %v360
    %408 = vmatprep.subr.mxu0 0.0
    %409 = vmatpush1.msra.mxu0 %v361
    %410 = vmatprep.subr.mxu0 0.0
    %411 = vmatpush1.msra.mxu0 %v362
    %412 = vmatprep.subr.mxu0 0.0
    %413 = vmatpush1.msra.mxu0 %v363
    %414 = vmatprep.subr.mxu0 0.0
    %415 = vmatpush1.msra.mxu0 %v364
    %416 = vmatprep.subr.mxu0 0.0
    %417 = vmatpush1.msra.mxu0 %v365
    %418 = vmatprep.subr.mxu0 0.0
    %419 = vmatpush1.msra.mxu0 %v366
    %420 = vmatprep.subr.mxu0 0.0
    %421 = vmatpush1.msra.mxu0 %v367
    %422 = vmatprep.subr.mxu0 0.0
    %423 = vmatpush1.msra.mxu0 %v368
    %424 = vmatprep.subr.mxu0 0.0
    %425 = vmatpush1.msra.mxu0 %v369
    %426 = vmatprep.subr.mxu0 0.0
    %427 = vmatpush1.msra.mxu0 %v370
    %428 = vmatprep.subr.mxu0 0.0
    %429 = vmatpush1.msra.mxu0 %v371
    %430 = vmatprep.subr.mxu0 0.0
    %431 = vmatpush1.msra.mxu0 %v372
    %432 = vmatprep.subr.mxu0 0.0
    %433 = vmatpush1.msra.mxu0 %v373
    %434 = vmatprep.subr.mxu0 0.0
    %435 = vmatpush1.msra.mxu0 %v374
    %436 = vmatprep.subr.mxu0 0.0
    %437 = vmatpush1.msra.mxu0 %v375
    %438 = vmatprep.subr.mxu0 0.0
    %439 = vmatpush1.msra.mxu0 %v376
    %440 = vmatprep.subr.mxu0 0.0
    %441 = vmatpush1.msra.mxu0 %v377
    %442 = vmatprep.subr.mxu0 0.0
    %443 = vmatpush1.msra.mxu0 %v378
    %444 = vmatprep.subr.mxu0 0.0
    %445 = vmatpush1.msra.mxu0 %v379
    %446 = vmatprep.mubr.f32.mxu0 %v347
    %447 = vmatmul.mubr.f32.gmra.mrb[0].mxu0 %v346
    %v448 = vpop.f32.mrb[0].mxu0
    %v449 = vadd.f32 %v381, %v448
    %v450 = vpop.f32.mrb[0].mxu0
    %451 = vdwg.mxu0
    %452 = vst [vmem:[#allocation8] sm:$0xff] %v449
    // Predicated region
    $region46: #{tpu_custom_call.1} parent=1 // pred_check
      _
    $region47: #{tpu_custom_call.1} parent=1 // pred_check_branch
      %454 = sbr.rel (0) target = $region49
    $region48: #{tpu_custom_call.1} parent=1 // pred_region
      %s456 = ssub.s32 128, 128
      %457 = vsyncadd [#allocation5], %s456
      %s459 = sshll.u32 [#allocation8], 4
      %s460 = int_to_ptr.vmem [resolvable:$true] %s459
      %462 = dma.vmem_to_hbm [thread:$0]  %s460, 128, %s9, [#allocation5]
    $region49: #{tpu_custom_call.1} parent=1 // pred_fallthru
      _
    // Predicated region
    $region50: #{tpu_custom_call.1} parent=1 // pred_check
      _
    $region51: #{tpu_custom_call.1} parent=1 // pred_check_branch
      %464 = sbr.rel (0) target = $region53
    $region52: #{tpu_custom_call.1} parent=1 // pred_region
      %465 = dma.done [#allocation5], 128
    $region53: #{tpu_custom_call.1} parent=1 // pred_fallthru
      _
    %466 = vsyncpa [#allocation4], 1
    %467 = vsyncpa [#allocation7], 1
    %468 = vsyncpa [#allocation5], 1

</llo_original>
